<compile_context>
chip_gen: v7x
topology: tpu7x:2x2x1
jax: 0.10.0
libtpu: 0.0.40
codegen_flags: <defaults>
</compile_context>

<pallas_src>
import math

import jax
import jax.numpy as jnp
from jax.experimental import pallas as pl
from jax.experimental.pallas import tpu as pltpu


MIN_VALUE = -0.3
MAX_VALUE = 1.3
LEAKY_SLOPE = 0.01  # torch.nn.LeakyReLU default

MAX_TILE_HW = 16384    # lanes per grid step (26 f32 rows * 16K lanes ~ 1.7 MiB/block)
MIN_GRID_STEPS = 4     # v7x megacore: keep both TensorCores fed
MIN_SPLIT_TILE = 2048  # never shrink tiles below this just to add grid steps


def _fused_kernel(x_ref, w_ref, b_ref, o_ref):
    # x_ref: (1, Cin, T)   -- one batch's (already-cropped) channels, spatial-on-lanes
    # w_ref: (Cout, Cin)   -- transposed conv weight
    # b_ref: (Cout, 1)
    # o_ref: (1, Cout, T)  -- final output tile (lane-dense)
    x = x_ref[0]          # (Cin, T)
    w = w_ref[...]        # (Cout, Cin)
    b = b_ref[...]        # (Cout, 1)

    # pointwise "conv transpose" == channel matmul (MXU), output channel-major
    v1 = jnp.dot(w, x, preferred_element_type=jnp.float32) + b   # (Cout, T)

    # clamp_min / clamp_max
    v2 = jnp.maximum(v1, MIN_VALUE)
    v3 = jnp.minimum(v2, MAX_VALUE)

    # Softsign: x / (1 + |x|)  (exact divide; kernel is HBM-bound so it's free)
    v4 = v3 / (1.0 + jnp.abs(v3))

    # LeakyReLU with slope < 1:  max(x, slope*x)
    v9 = jnp.maximum(v4, LEAKY_SLOPE * v4)

    o_ref[0] = v9.astype(o_ref.dtype)


def _spatial_tile(total, n_batch):
    """Pick the per-step lane tile for the flattened (cropped) spatial axis."""
    tile = min(total, MAX_TILE_HW)
    # Ensure enough grid steps for v7x megacore, but never below MIN_SPLIT_TILE.
    while (n_batch * math.ceil(total / tile) < MIN_GRID_STEPS
           and tile >= 2 * MIN_SPLIT_TILE):
        tile //= 2
    # When the axis is split, keep tiles lane-aligned (multiple of 128) so every
    # full step issues unmasked vector stores (last ragged tile is masked by Pallas).
    if tile < total:
        tile = max(128, tile - tile % 128)
    return tile


def model_forward(x_nchw, weight, bias):
    """x_nchw: (N, 10, H, W) f32.  weight: (Cin, Cout[,1,1]).  Returns (N, 16, H-2, W-2)."""
    N, Cin, H, W = x_nchw.shape
    if weight.ndim == 4:            # PyTorch ConvTranspose2d layout (Cin, Cout, 1, 1)
        weight = weight[:, :, 0, 0]
    Cout = weight.shape[1]
    Ho, Wo = H - 2, W - 2
    HWo = Ho * Wo

    # padding=1 on a k=1,s=1 conv-transpose == crop 1 pixel per border.  Crop the
    # input (10 channels) instead of the output (16) so the kernel writes the
    # final array and no trailing slice pass over the output is needed.
    x_crop = x_nchw[:, :, 1:H - 1, 1:W - 1].reshape(N, Cin, HWo)   # (N, Cin, Ho*Wo)
    w_t = weight.T                                                 # (Cout, Cin) tiny
    b_col = bias.reshape(Cout, 1)                                  # (Cout, 1)

    tile = _spatial_tile(HWo, N)
    n_tiles = pl.cdiv(HWo, tile)

    out_flat = pl.pallas_call(
        _fused_kernel,
        out_shape=jax.ShapeDtypeStruct((N, Cout, HWo), jnp.float32),
        grid=(N, n_tiles),
        in_specs=[
            pl.BlockSpec((1, Cin, tile), lambda n, t: (n, 0, t)),
            pl.BlockSpec((Cout, Cin), lambda n, t: (0, 0)),
            pl.BlockSpec((Cout, 1), lambda n, t: (0, 0)),
        ],
        out_specs=pl.BlockSpec((1, Cout, tile), lambda n, t: (n, 0, t)),
        compiler_params=pltpu.CompilerParams(
            dimension_semantics=("parallel", "parallel")),
    )(x_crop, w_t, b_col)

    # Already channel-major and already cropped -> just un-flatten spatial dims.
    return out_flat.reshape(N, Cout, Ho, Wo)


def _reference(x_nchw, weight, bias):
    """Pure-JAX reference of the PyTorch forward (for a sanity check)."""
    if weight.ndim == 4:
        weight = weight[:, :, 0, 0]
    v1 = jnp.einsum("ncHW,co->noHW", x_nchw, weight) + bias[None, :, None, None]
    H, W = x_nchw.shape[2], x_nchw.shape[3]
    v1 = v1[:, :, 1:H - 1, 1:W - 1]
    v3 = jnp.clip(v1, MIN_VALUE, MAX_VALUE)
    v4 = v3 / (1.0 + jnp.abs(v3))
    return jnp.where(v4 >= 0.0, v4, LEAKY_SLOPE * v4)


if __name__ == "__main__":
    key = jax.random.PRNGKey(0)
    k_x, k_w, k_b = jax.random.split(key, 3)

    N, Cin, Cout, H, W = 2, 10, 16, 16, 16

    x = jax.random.normal(k_x, (N, Cin, H, W), dtype=jnp.float32)

    # PyTorch ConvTranspose2d weight layout: (in_ch, out_ch, kH, kW)
    fan_in = Cout * 1 * 1
    bound = 1.0 / math.sqrt(fan_in)
    weight = jax.random.uniform(k_w, (Cin, Cout, 1, 1), jnp.float32, -bound, bound)
    bias = jax.random.uniform(k_b, (Cout,), jnp.float32, -bound, bound)

    out = model_forward(x, weight, bias)
    jax.block_until_ready(out)

    assert out.shape == (N, Cout, H - 2, W - 2), out.shape

    ref = _reference(x, weight, bias)
    assert jnp.allclose(out, ref, rtol=2e-2, atol=2e-2), "mismatch vs reference"

    print("KERNEL_OK")
</pallas_src>

<mosaic_0001>
module attributes {stable_mosaic.version = 11 : i64} {
  func.func @_fused_kernel(%arg0: i32, %arg1: i32, %arg2: memref<1x10x196xf32, #tpu.memory_space<vmem>>, %arg3: memref<16x10xf32, #tpu.memory_space<vmem>>, %arg4: memref<16x1xf32, #tpu.memory_space<vmem>>, %arg5: memref<1x16x196xf32, #tpu.memory_space<vmem>>) attributes {dimension_semantics = [#tpu.dimension_semantics<parallel>, #tpu.dimension_semantics<parallel>], iteration_bounds = array<i64: 2, 1>, scalar_prefetch = 0 : i64, scratch_operands = 0 : i64, tpu.core_type = #tpu.core_type<tc>, window_params = [{transform_indices = @transform_0, window_bounds = array<i64: 1, 10, 196>}, {pipeline_mode = #tpu.pipeline_mode<synchronous>, transform_indices = @transform_1, window_bounds = array<i64: 16, 10>}, {pipeline_mode = #tpu.pipeline_mode<synchronous>, transform_indices = @transform_2, window_bounds = array<i64: 16, 1>}, {transform_indices = @transform_3, window_bounds = array<i64: 1, 16, 196>}]} {
    %c0 = arith.constant 0 : index
    %c0_0 = arith.constant 0 : index
    %c0_1 = arith.constant 0 : index
    %0 = vector.load %arg2[%c0, %c0_0, %c0_1] : memref<1x10x196xf32, #tpu.memory_space<vmem>>, vector<1x10x196xf32>
    %1 = vector.shape_cast %0 : vector<1x10x196xf32> to vector<10x196xf32>
    %c0_2 = arith.constant 0 : index
    %c0_3 = arith.constant 0 : index
    %2 = vector.load %arg3[%c0_2, %c0_3] : memref<16x10xf32, #tpu.memory_space<vmem>>, vector<16x10xf32>
    %c0_4 = arith.constant 0 : index
    %c0_5 = arith.constant 0 : index
    %3 = vector.load %arg4[%c0_4, %c0_5] : memref<16x1xf32, #tpu.memory_space<vmem>>, vector<16x1xf32>
    %cst = arith.constant dense<0.000000e+00> : vector<16x196xf32>
    %4 = tpu.matmul %2, %1, %cst {dimension_numbers = #tpu.dot_dimension_numbers<[1], [0], [0], [1], [0, 0, 1, 1], [], []>} : vector<16x10xf32>, vector<10x196xf32>, vector<16x196xf32> -> vector<16x196xf32>
    %5 = vector.broadcast %3 : vector<16x1xf32> to vector<16x196xf32>
    %6 = arith.addf %4, %5 : vector<16x196xf32>
    %cst_6 = arith.constant -3.000000e-01 : f32
    %7 = vector.broadcast %cst_6 : f32 to vector<16x196xf32>
    %8 = arith.maximumf %6, %7 : vector<16x196xf32>
    %cst_7 = arith.constant 1.300000e+00 : f32
    %9 = vector.broadcast %cst_7 : f32 to vector<16x196xf32>
    %10 = arith.minimumf %8, %9 : vector<16x196xf32>
    %11 = math.absf %10 : vector<16x196xf32>
    %cst_8 = arith.constant 1.000000e+00 : f32
    %12 = vector.broadcast %cst_8 : f32 to vector<16x196xf32>
    %13 = arith.addf %12, %11 : vector<16x196xf32>
    %14 = arith.divf %10, %13 : vector<16x196xf32>
    %cst_9 = arith.constant 0.00999999977 : f32
    %15 = vector.broadcast %cst_9 : f32 to vector<16x196xf32>
    %16 = arith.mulf %15, %14 : vector<16x196xf32>
    %17 = arith.maximumf %14, %16 : vector<16x196xf32>
    %c0_10 = arith.constant 0 : index
    %c0_11 = arith.constant 0 : index
    %c0_12 = arith.constant 0 : index
    %18 = vector.load %arg5[%c0_10, %c0_11, %c0_12] : memref<1x16x196xf32, #tpu.memory_space<vmem>>, vector<1x16x196xf32>
    %19 = vector.shape_cast %18 : vector<1x16x196xf32> to vector<16x196xf32>
    %20 = vector.shape_cast %17 : vector<16x196xf32> to vector<1x16x196xf32>
    tpu.vector_store %arg5[%c0_10, %c0_11, %c0_12], %20 {strides = array<i32>} : memref<1x16x196xf32, #tpu.memory_space<vmem>>, vector<1x16x196xf32>,
    return
  }
  func.func @transform_0(%arg0: i32, %arg1: i32) -> (i32, i32, i32) {
    %c0_i32 = arith.constant 0 : i32
    %c0_i32_0 = arith.constant 0 : i32
    return %arg0, %c0_i32, %arg1 : i32, i32, i32
  }
  func.func @transform_1(%arg0: i32, %arg1: i32) -> (i32, i32) {
    %c0_i32 = arith.constant 0 : i32
    %c0_i32_0 = arith.constant 0 : i32
    %c0_i32_1 = arith.constant 0 : i32
    return %c0_i32, %c0_i32_0 : i32, i32
  }
  func.func @transform_2(%arg0: i32, %arg1: i32) -> (i32, i32) {
    %c0_i32 = arith.constant 0 : i32
    %c0_i32_0 = arith.constant 0 : i32
    %c0_i32_1 = arith.constant 0 : i32
    return %c0_i32, %c0_i32_0 : i32, i32
  }
  func.func @transform_3(%arg0: i32, %arg1: i32) -> (i32, i32, i32) {
    %c0_i32 = arith.constant 0 : i32
    %c0_i32_0 = arith.constant 0 : i32
    return %arg0, %c0_i32, %arg1 : i32, i32, i32
  }
}

</mosaic_0001>

<llo_original>
// kernel: tpu_custom_call.1
$region0: #{tpu_custom_call.1}
  #allocation0 [shape = 'u32[]', space=smem, size = 0x4, offset = 0x4, fixed_abs, tag = 'smem constant byte address 0x4 - core index']
  #allocation1 [shape = 'u32[144,128]{1,0:T(1,128)}', space=vmem, size = 0x12000, scoped, tag = 'internal scratch']
  %s0 = inlined_call_operand.vmem [shape: f32[2,10,196], index: 0, kind: input, shape index: {}]
  %s1 = inlined_call_operand.vmem [shape: f32[16,10], index: 1, kind: input, shape index: {}]
  %s2 = inlined_call_operand.vmem [shape: f32[16,1], index: 2, kind: input, shape index: {}]
  %s3 = inlined_call_operand.hbm [shape: f32[2,16,196], index: 3, kind: output, shape index: {}]
  %s4 = sld [smem:[#allocation0]]
  $region45: #{tpu_custom_call.1} parent=0
    _
  %s6 = ssub.s32 1, %s4
  %s7 = scalar_select 0, %s6, %s4
  $region1: #{tpu_custom_call.1} parent=0
    #allocation2 [shape = 'u8[32768]{0}', space=vmem, size = 0x8000, scoped, tag = 'output window, operand 0']
    #allocation3 [shape = 's32[2]{0}', space=sflag, size = 0x8, scoped, tag = 'scoped memory for tpu_custom_call.1']
    %8 = vsyncpa [#allocation3], 0
    %s9 = scalar_lea.sflag [#allocation3], 1
    %10 = vsyncpa %s9, 0
    loop: start=0, step=1, limit=4
    $region2: #{tpu_custom_call.1} parent=1 // loop_pre_header
      _
    $region3: #{tpu_custom_call.1} parent=1 // loop_header
      %s12 = sphi 0, %s16
      %p13 = scmp.ge.s32.totalorder %s12, 4
      %s19 = sphi 0, %s31
      %s20 = sphi 0, %s27
      %s21 = sphi 0, %s19
      %s22 = sphi 0, %s20
      %s23 = sphi 0, %s21
      %s24 = sphi 0, %s22
      %s36 = sphi 0, %s38
      %s39 = sphi 0, %s36
      %s40 = sphi 0, %s39
      %s56 = sphi 0, %s40
      %s60 = sphi 0, %s60
      %s62 = sphi 0, %s60
      %s63 = sphi 0, %s62
      %s77 = sphi 0, %s63
      %s81 = sphi 0, %s81
      %s83 = sphi 0, %s81
      %s84 = sphi 0, %s83
      %s98 = sphi 0, %s84
      %s106 = sphi 0, %s108
      %s109 = sphi 0, %s106
      %s110 = sphi 0, %s109
      %s126 = sphi 0, %s110
    $region4: #{tpu_custom_call.1} parent=1 // loop_header_branch
      %15 = sbr.rel (%p13) target = $region8
    $region5: #{tpu_custom_call.1} parent=1 // loop_body
      %s17 = ssub.s32 %s12, 1
      %s18 = ssub.s32 %s12, 2
      %s25 = sadd.s32 1, %s20
      %p26 = scmp.ge.s32.totalorder %s25, 1
      %s27 = scalar_select %p26, 0, %s25
      %s28 = sadd.s32 1, %s19
      %s29 = scalar_select %p26, %s28, %s19
      %p30 = scmp.ge.s32.totalorder %s29, 2
      %s31 = scalar_select %p30, 0, %s29
      %s32 = ssub.s32 %s19, %s31
      %s33 = ssub.s32 %s20, %s27
      %s34 = sor.u32 %s32, %s33
      %p35 = scmp.eq.s32.totalorder %s34, 0
      %s37 = sadd.s32 %s36, 1
      %s38 = scalar_select %p35, %s36, %s37
      %p41 = pneg %p35
      %p42 = scmp.eq.s32.totalorder %s12, 1
      %p43 = por %p41, %p42
      %p44 = scmp.ne.s32.totalorder %s36, %s39
      %p45 = scmp.eq.s32.totalorder %s12, 0
      %p46 = por %p44, %p45
      %p47 = scmp.ne.s32.totalorder %s36, %s39
      %p48 = scmp.eq.s32.totalorder %s17, 1
      %p49 = por %p47, %p48
      %p50 = scmp.ne.s32.totalorder %s39, %s40
      %p51 = scmp.eq.s32.totalorder %s17, 0
      %p52 = por %p50, %p51
      %p53 = scmp.ne.s32.totalorder %s39, %s40
      %p54 = scmp.eq.s32.totalorder %s18, 1
      %p55 = por %p53, %p54
      %p57 = scmp.ne.s32.totalorder %s40, %s56
      %p58 = scmp.eq.s32.totalorder %s18, 0
      %p59 = por %p57, %p58
      %s61 = sadd.s32 %s60, 1
      %p64 = scmp.eq.s32.totalorder %s12, 1
      %p65 = scmp.ne.s32.totalorder %s60, %s62
      %p66 = scmp.eq.s32.totalorder %s12, 0
      %p67 = por %p65, %p66
      %p68 = scmp.ne.s32.totalorder %s60, %s62
      %p69 = scmp.eq.s32.totalorder %s17, 1
      %p70 = por %p68, %p69
      %p71 = scmp.ne.s32.totalorder %s62, %s63
      %p72 = scmp.eq.s32.totalorder %s17, 0
      %p73 = por %p71, %p72
      %p74 = scmp.ne.s32.totalorder %s62, %s63
      %p75 = scmp.eq.s32.totalorder %s18, 1
      %p76 = por %p74, %p75
      %p78 = scmp.ne.s32.totalorder %s63, %s77
      %p79 = scmp.eq.s32.totalorder %s18, 0
      %p80 = por %p78, %p79
      %s82 = sadd.s32 %s81, 1
      %p85 = scmp.eq.s32.totalorder %s12, 1
      %p86 = scmp.ne.s32.totalorder %s81, %s83
      %p87 = scmp.eq.s32.totalorder %s12, 0
      %p88 = por %p86, %p87
      %p89 = scmp.ne.s32.totalorder %s81, %s83
      %p90 = scmp.eq.s32.totalorder %s17, 1
      %p91 = por %p89, %p90
      %p92 = scmp.ne.s32.totalorder %s83, %s84
      %p93 = scmp.eq.s32.totalorder %s17, 0
      %p94 = por %p92, %p93
      %p95 = scmp.ne.s32.totalorder %s83, %s84
      %p96 = scmp.eq.s32.totalorder %s18, 1
      %p97 = por %p95, %p96
      %p99 = scmp.ne.s32.totalorder %s84, %s98
      %p100 = scmp.eq.s32.totalorder %s18, 0
      %p101 = por %p99, %p100
      %s102 = ssub.s32 %s19, %s31
      %s103 = ssub.s32 %s20, %s27
      %s104 = sor.u32 %s102, %s103
      %p105 = scmp.eq.s32.totalorder %s104, 0
      %s107 = sadd.s32 %s106, 1
      %s108 = scalar_select %p105, %s106, %s107
      %p111 = pneg %p105
      %p112 = scmp.eq.s32.totalorder %s12, 1
      %p113 = por %p111, %p112
      %p114 = scmp.ne.s32.totalorder %s106, %s109
      %p115 = scmp.eq.s32.totalorder %s12, 0
      %p116 = por %p114, %p115
      %p117 = scmp.ne.s32.totalorder %s106, %s109
      %p118 = scmp.eq.s32.totalorder %s17, 1
      %p119 = por %p117, %p118
      %p120 = scmp.ne.s32.totalorder %s109, %s110
      %p121 = scmp.eq.s32.totalorder %s17, 0
      %p122 = por %p120, %p121
      %p123 = scmp.ne.s32.totalorder %s109, %s110
      %p124 = scmp.eq.s32.totalorder %s18, 1
      %p125 = por %p123, %p124
      %p127 = scmp.ne.s32.totalorder %s110, %s126
      %p128 = scmp.eq.s32.totalorder %s18, 0
      %p129 = por %p127, %p128
      %p130 = scmp.le.s32.totalorder 1, %s12
      %p131 = scmp.lt.s32.totalorder %s12, 3
      %p132 = pnand %p130, %p131
      %p133 = pneg %p132
      // Predicated region
      $region9: #{tpu_custom_call.1} parent=5 // pred_check
        _
      $region10: #{tpu_custom_call.1} parent=5 // pred_check_branch
        %135 = sbr.rel (%p132) target = $region12
      $region11: #{tpu_custom_call.1} parent=5 // pred_region
        %s136 = ssub.s32 %s12, 1
        // Predicated region
        $region13: #{tpu_custom_call.1} parent=11 // pred_check
          %p137 = pneg %p73
        $region14: #{tpu_custom_call.1} parent=11 // pred_check_branch
          %139 = sbr.rel (%p137) target = $region16
        $region15: #{tpu_custom_call.1} parent=11 // pred_region
          _
        $region16: #{tpu_custom_call.1} parent=11 // pred_fallthru
          _
        // Predicated region
        $region17: #{tpu_custom_call.1} parent=11 // pred_check
          %p140 = pneg %p94
        $region18: #{tpu_custom_call.1} parent=11 // pred_check_branch
          %142 = sbr.rel (%p140) target = $region20
        $region19: #{tpu_custom_call.1} parent=11 // pred_region
          _
        $region20: #{tpu_custom_call.1} parent=11 // pred_fallthru
          _
      $region12: #{tpu_custom_call.1} parent=5 // pred_fallthru
        _
      %p143 = scmp.lt.s32.totalorder %s12, 2
      // Predicated region
      $region21: #{tpu_custom_call.1} parent=5 // pred_check
        %p144 = pneg %p143
      $region22: #{tpu_custom_call.1} parent=5 // pred_check_branch
        %146 = sbr.rel (%p144) target = $region24
      $region23: #{tpu_custom_call.1} parent=5 // pred_region
        // Predicated region
        $region25: #{tpu_custom_call.1} parent=23 // pred_check
          %p147 = pneg %p46
        $region26: #{tpu_custom_call.1} parent=23 // pred_check_branch
          %149 = sbr.rel (%p147) target = $region28
        $region27: #{tpu_custom_call.1} parent=23 // pred_region
          %s150 = smul.u32 2, %s20
          %p151 = scmp.lt.s32.totalorder %s19, 1
          %s152 = scalar_select %p151, %s19, 1
          %p153 = scmp.lt.s32.totalorder %s150, 1
          %s154 = scalar_select %p153, %s150, 1
          %s155 = smul.addr %s152, 4
          %s156 = sadd.s32 %s154, %s155
          %s157 = smul.addr %s156, 8
          %s158 = scalar_lea.vmem %s0, %s157
          %s159 = smul.u32 2, %s20
        $region28: #{tpu_custom_call.1} parent=23 // pred_fallthru
          _
      $region24: #{tpu_custom_call.1} parent=5 // pred_fallthru
        _
      %p160 = scmp.le.s32.totalorder 1, %s12
      %p161 = scmp.lt.s32.totalorder %s12, 3
      %p162 = pnand %p160, %p161
      %p163 = pneg %p162
      // Predicated region
      $region29: #{tpu_custom_call.1} parent=5 // pred_check
        _
      $region30: #{tpu_custom_call.1} parent=5 // pred_check_branch
        %165 = sbr.rel (%p162) target = $region32
      $region31: #{tpu_custom_call.1} parent=5 // pred_region
        %s166 = ssub.s32 %s12, 1
        %s167 = smul.u32 2, %s22
        %p168 = scmp.lt.s32.totalorder %s21, 1
        %s169 = scalar_select %p168, %s21, 1
        %p170 = scmp.lt.s32.totalorder %s167, 1
        %s171 = scalar_select %p170, %s167, 1
        %s172 = smul.addr %s169, 4
        %s173 = sadd.s32 %s171, %s172
        %s174 = smul.addr %s173, 8
        %s175 = scalar_lea.vmem %s0, %s174
        %p176 = pneg %p52
        %p177 = pneg %p49
        %p178 = pneg %p73
        %p179 = pneg %p70
        %p180 = pneg %p94
        %p181 = pneg %p91
        %p182 = pneg %p122
        %p183 = pneg %p119
        %s184 = sand.u32 %s109, 1
        %s185 = scalar_lea.sflag [#allocation3], %s184
        %s186 = sand.u32 %s109, 1
        %s187 = smul.addr %s186, 32
        %s188 = scalar_lea.vmem [#allocation2], %s187
        %s189 = smul.u32 2, %s22
        %p190 = scmp.lt.s32.totalorder %s21, 1
        %s191 = scalar_select %p190, %s21, 1
        %p192 = scmp.lt.s32.totalorder %s189, 1
        %s193 = scalar_select %p192, %s189, 1
        %s194 = smul.addr %s191, 4
        %s195 = sadd.s32 %s193, %s194
        %s196 = smul.addr %s195, 8
        %s197 = scalar_lea.vmem %s0, %s196
        %s198 = smul.u32 2, %s22
        %s199 = smul.u32 2, %s22
        %v200 = vld [vmem:[%s197] sm:$0xff]
        %v201 = vld [vmem:[%s197 + $0x8] sm:$0xff]
        %v202 = vld [vmem:[%s197 + $0x10] sm:$0x3]
        %v203 = vld [vmem:[%s197 + $0x18] sm:$0x3]
        %v204 = vld [vmem:[%s1] sm:$0xff]
        %v205 = vld [vmem:[%s1 + $0x8] sm:$0xff]
        %v206 = vld [vmem:[%s2] sm:$0xff]
        %v207 = vld [vmem:[%s2 + $0x8] sm:$0xff]
        %209 = vset.pattern.permute.xlu0 0
        %210 = vperm.xlu0 %209, %v206
        %v211 = vpop.permute.xlu0 %210
        %214 = vset.pattern.permute.xlu0 0
        %215 = vperm.xlu0 %214, %v207
        %v216 = vpop.permute.xlu0 %215
        %vm218 = vcmask 80896
        %v220 = vsel %vm218, %v204, 0
        %v223 = vsel %vm218, %v205, 0
        %vm225 = vcmask 1041408
        %v227 = vsel %vm225, %v202, 0
        %v230 = vsel %vm225, %v203, 0
        %232 = vmatprep.subr.mxu0 %v201
        %233 = vmatpush1.msra.mxu0 %v200
        %234 = vmatprep.subr.mxu0 %v230
        %235 = vmatpush1.msra.mxu0 %v227
        %236 = vmatprep.subr.mxu0 0.0
        %237 = vmatpush1.msra.mxu0 0.0
        %238 = vmatprep.subr.mxu0 0.0
        %239 = vmatpush1.msra.mxu0 0.0
        %240 = vmatprep.subr.mxu0 0.0
        %241 = vmatpush1.msra.mxu0 0.0
        %242 = vmatprep.subr.mxu0 0.0
        %243 = vmatpush1.msra.mxu0 0.0
        %244 = vmatprep.subr.mxu0 0.0
        %245 = vmatpush1.msra.mxu0 0.0
        %246 = vmatprep.subr.mxu0 0.0
        %247 = vmatpush1.msra.mxu0 0.0
        %248 = vmatprep.subr.mxu0 0.0
        %249 = vmatpush1.msra.mxu0 0.0
        %250 = vmatprep.subr.mxu0 0.0
        %251 = vmatpush1.msra.mxu0 0.0
        %252 = vmatprep.subr.mxu0 0.0
        %253 = vmatpush1.msra.mxu0 0.0
        %254 = vmatprep.subr.mxu0 0.0
        %255 = vmatpush1.msra.mxu0 0.0
        %256 = vmatprep.subr.mxu0 0.0
        %257 = vmatpush1.msra.mxu0 0.0
        %258 = vmatprep.subr.mxu0 0.0
        %259 = vmatpush1.msra.mxu0 0.0
        %260 = vmatprep.subr.mxu0 0.0
        %261 = vmatpush1.msra.mxu0 0.0
        %262 = vmatprep.subr.mxu0 0.0
        %263 = vmatpush1.msra.mxu0 0.0
        %264 = vmatprep.subr.mxu0 0.0
        %265 = vmatpush1.msra.mxu0 0.0
        %266 = vmatprep.subr.mxu0 0.0
        %267 = vmatpush1.msra.mxu0 0.0
        %268 = vmatprep.subr.mxu0 0.0
        %269 = vmatpush1.msra.mxu0 0.0
        %270 = vmatprep.subr.mxu0 0.0
        %271 = vmatpush1.msra.mxu0 0.0
        %272 = vmatprep.subr.mxu0 0.0
        %273 = vmatpush1.msra.mxu0 0.0
        %274 = vmatprep.subr.mxu0 0.0
        %275 = vmatpush1.msra.mxu0 0.0
        %276 = vmatprep.subr.mxu0 0.0
        %277 = vmatpush1.msra.mxu0 0.0
        %278 = vmatprep.subr.mxu0 0.0
        %279 = vmatpush1.msra.mxu0 0.0
        %280 = vmatprep.subr.mxu0 0.0
        %281 = vmatpush1.msra.mxu0 0.0
        %282 = vmatprep.subr.mxu0 0.0
        %283 = vmatpush1.msra.mxu0 0.0
        %284 = vmatprep.subr.mxu0 0.0
        %285 = vmatpush1.msra.mxu0 0.0
        %286 = vmatprep.subr.mxu0 0.0
        %287 = vmatpush1.msra.mxu0 0.0
        %288 = vmatprep.subr.mxu0 0.0
        %289 = vmatpush1.msra.mxu0 0.0
        %290 = vmatprep.subr.mxu0 0.0
        %291 = vmatpush1.msra.mxu0 0.0
        %292 = vmatprep.subr.mxu0 0.0
        %293 = vmatpush1.msra.mxu0 0.0
        %294 = vmatprep.subr.mxu0 0.0
        %295 = vmatpush1.msra.mxu0 0.0
        %296 = vmatprep.mubr.f32.mxu0 0.0
        %297 = vmatmul.mubr.f32.gmra.mrb[0].mxu0 %v220
        %v298 = vpop.f32.mrb[0].mxu0
        %v299 = vadd.f32 %v211, %v298
        %v300 = vpop.f32.mrb[0].mxu0
        %v301 = vadd.f32 %v211, %v300
        %302 = vmatprep.mubr.f32.mxu0 0.0
        %303 = vmatmul.mubr.f32.gmra.mrb[0].mxu0 %v223
        %v304 = vpop.f32.mrb[0].mxu0
        %v305 = vadd.f32 %v216, %v304
        %v306 = vpop.f32.mrb[0].mxu0
        %v307 = vadd.f32 %v216, %v306
        %308 = vdwg.mxu0
        %v309 = vmax.f32 %v299, -0.3
        %v310 = vmax.f32 %v301, -0.3
        %v311 = vmax.f32 %v305, -0.3
        %v312 = vmax.f32 %v307, -0.3
        %v313 = vmin.f32 %v309, 1.3
        %v314 = vmin.f32 %v310, 1.3
        %v315 = vmin.f32 %v311, 1.3
        %v316 = vmin.f32 %v312, 1.3
        %v317 = vand.u32 2147483647, %v313
        %v318 = vand.u32 2147483647, %v314
        %v319 = vand.u32 2147483647, %v315
        %v320 = vand.u32 2147483647, %v316
        %v321 = vadd.f32 %v317, 1.0
        %v322 = vadd.f32 %v318, 1.0
        %v323 = vadd.f32 %v319, 1.0
        %v324 = vadd.f32 %v320, 1.0
        %v325 = vrcp.pop %v321
        %v326 = vmul.f32 %v313, %v325
        %v327 = vrcp.pop %v322
        %v328 = vmul.f32 %v314, %v327
        %v329 = vrcp.pop %v323
        %v330 = vmul.f32 %v315, %v329
        %v331 = vrcp.pop %v324
        %v332 = vmul.f32 %v316, %v331
        %v333 = vmul.f32 %v326, 0.01
        %v334 = vmul.f32 %v328, 0.01
        %v335 = vmul.f32 %v330, 0.01
        %v336 = vmul.f32 %v332, 0.01
        %v337 = vmax.f32 %v326, %v333
        %v338 = vmax.f32 %v328, %v334
        %v339 = vmax.f32 %v330, %v335
        %v340 = vmax.f32 %v332, %v336
        %341 = vst [vmem:[%s188] sm:$0xff] %v337
        %vm342 = vcmask 556032
        %343 = vst.msk [vmem:[%s188 + $0x8] sm:$0xff] %vm342, %v338
        %344 = vst [vmem:[%s188 + $0x10] sm:$0xff] %v339
        %345 = vst.msk [vmem:[%s188 + $0x18] sm:$0xff] %vm342, %v340
        %s346 = sand.u32 %s109, 1
        %s347 = scalar_lea.sflag [#allocation3], %s346
        %s348 = sand.u32 %s109, 1
        %s349 = smul.addr %s348, 32
        %s350 = scalar_lea.vmem [#allocation2], %s349
        // Predicated region
        $region33: #{tpu_custom_call.1} parent=31 // pred_check
          %p351 = pneg %p119
        $region34: #{tpu_custom_call.1} parent=31 // pred_check_branch
          %353 = sbr.rel (%p351) target = $region36
        $region35: #{tpu_custom_call.1} parent=31 // pred_region
          %s354 = smul.u32 2, %s22
          %s356 = ssub.s32 512, 512
          %357 = vsyncadd %s347, %s356
          %s358 = smul.addr %s21, 4
          %s359 = sadd.s32 %s354, %s358
          %s360 = smul.addr %s359, 128
          %s361 = scalar_lea.hbm %s3, %s360
          %s362 = sshll.u32 %s350, 4
          %s363 = int_to_ptr.vmem [resolvable:$true] %s362
          %368 = dma.vmem_to_hbm [thread:$0]  %s363, 512, %s361, %s347, 256, 256, 16
        $region36: #{tpu_custom_call.1} parent=31 // pred_fallthru
          _
      $region32: #{tpu_custom_call.1} parent=5 // pred_fallthru
        _
      %p369 = scmp.le.s32.totalorder 2, %s12
      // Predicated region
      $region37: #{tpu_custom_call.1} parent=5 // pred_check
        %p370 = pneg %p369
      $region38: #{tpu_custom_call.1} parent=5 // pred_check_branch
        %372 = sbr.rel (%p370) target = $region40
      $region39: #{tpu_custom_call.1} parent=5 // pred_region
        %s373 = ssub.s32 %s12, 2
        // Predicated region
        $region41: #{tpu_custom_call.1} parent=39 // pred_check
          %p374 = pneg %p125
        $region42: #{tpu_custom_call.1} parent=39 // pred_check_branch
          %376 = sbr.rel (%p374) target = $region44
        $region43: #{tpu_custom_call.1} parent=39 // pred_region
          %s377 = sand.u32 %s110, 1
          %s378 = scalar_lea.sflag [#allocation3], %s377
          %s379 = sand.u32 %s110, 1
          %s380 = smul.addr %s379, 32
          %s381 = scalar_lea.vmem [#allocation2], %s380
          %382 = dma.done %s378, 512
        $region44: #{tpu_custom_call.1} parent=39 // pred_fallthru
          _
      $region40: #{tpu_custom_call.1} parent=5 // pred_fallthru
        _
    $region6: #{tpu_custom_call.1} parent=1 // loop_footer
      %s16 = sadd.s32 1, %s12
    $region7: #{tpu_custom_call.1} parent=1 // loop_footer_branch
      %11 = sbr.rel target = $region3
    $region8: #{tpu_custom_call.1} parent=1 // loop_exit
      _
    %383 = vsyncpa [#allocation3], 1
    %s384 = scalar_lea.sflag [#allocation3], 1
    %385 = vsyncpa %s384, 1

</llo_original>
